<compile_context>
chip_gen: v7x
topology: tpu7x:2x2x1
jax: 0.10.0
libtpu: 0.0.40
codegen_flags: <defaults>
</compile_context>

<pallas_src>
import math

import jax
import jax.numpy as jnp
from jax.experimental import pallas as pl
from jax.experimental.pallas import tpu as pltpu


def _vertices_expand_kernel(v_ref, o_ref):
    # v_ref: (1, W) vertex slab (same block every grid step -> fetched once)
    # o_ref: (bt, W) output row tile
    o_ref[...] = jnp.broadcast_to(v_ref[...], o_ref.shape)


def _pick_row_tile(rows: int, bytes_per_row: int,
                   target_bytes: int = 8 * 1024 * 1024) -> int:
    """Pick an output row-tile size.

    Returns either the full row extent (always a legal block) or a multiple
    of 8 (sublane constraint).  Targets ~8 MiB per tile and keeps >= 2 grid
    steps for non-trivial outputs so v7x megacore can split the writes.
    """
    if rows <= 8:
        return rows
    bt = max(8, (target_bytes // max(1, bytes_per_row)) // 8 * 8)
    # Keep >= 2 grid steps when the output is > ~1 MiB (v7x two-TC split).
    if rows * bytes_per_row > (1 << 20) and rows >= 16:
        half = (rows // 2) // 8 * 8
        if half >= 8:
            bt = min(bt, half)
    return min(bt, rows)


def _expand_rows(slab: jax.Array, rows: int, width: int) -> jax.Array:
    """Broadcast a (1, width) slab into a (rows, width) array on-chip."""
    itemsize = slab.dtype.itemsize
    row_bytes = width * itemsize
    bt = _pick_row_tile(rows, row_bytes)
    grid = (pl.cdiv(rows, bt),)

    # Double-buffered output tiles + (resident, double-described) input slab.
    vmem_needed = 2 * bt * row_bytes + 2 * row_bytes + (2 << 20)
    cp_kwargs = dict(dimension_semantics=("parallel",))
    if vmem_needed > (16 << 20):  # only raise above the smallest (v5e) default
        cp_kwargs["vmem_limit_bytes"] = min(vmem_needed, 64 << 20)

    return pl.pallas_call(
        _vertices_expand_kernel,
        out_shape=jax.ShapeDtypeStruct((rows, width), slab.dtype),
        grid_spec=pltpu.PrefetchScalarGridSpec(
            num_scalar_prefetch=0,
            grid=grid,
            in_specs=[
                # Constant index_map -> slab fetched once and stays resident.
                pl.BlockSpec((1, width), lambda i: (0, 0)),
            ],
            out_specs=pl.BlockSpec((bt, width), lambda i: (i, 0)),
        ),
        compiler_params=pltpu.CompilerParams(**cp_kwargs),
    )(slab)


def vertices_forward(x: jax.Array, vertices: jax.Array) -> jax.Array:
    """Mirror of Vertices.forward: broadcast (1, V, 3) vertices to (B, V, 3).

    Only x's leading (batch) dimension is used, matching torch's
    `self.vertices.expand(b, *self.vertices.shape[1:])`.
    """
    b = x.shape[0]
    _, V, D = vertices.shape
    L = V * D
    flat = vertices.reshape(1, L)  # lane-dense, xyz-interleaved (row-major)

    # Fast path: fully lane-dense 128-wide stores via slab replication.
    W = math.lcm(L, 128)
    R = W // L
    if b % R == 0 and b >= R:
        rows = b // R
        slab = flat if R == 1 else jnp.tile(flat, (1, R))  # (1, W), tiny
        out = _expand_rows(slab, rows, W)                   # (rows, W)
    else:
        # Unpadded (b, L) output: last block dim == full extent is legal even
        # when L % 128 != 0; tail lanes use masked stores but no dead bytes
        # are written and no post-kernel slice pass is needed.
        out = _expand_rows(flat, b, L)                      # (b, L)

    # Contiguous row-major buffer of exactly b*V*D elements -> free reshape.
    return out.reshape(b, V, D)


if __name__ == "__main__":
    key = jax.random.PRNGKey(0)
    k_v, k_x = jax.random.split(key)

    # Synthetic deterministic "mesh" vertex buffer: (1, V, 3).
    # TODO(synk): original module loads vertices from a .obj file
    # (TriangleMesh.from_obj); file I/O is replaced by a synthetic buffer.
    V = 32
    vertices = jax.random.normal(k_v, (1, V, 3), dtype=jnp.float32)

    # Forward input: NCHW tensor; only the batch size matters.
    x_small = jax.random.normal(k_x, (2, 4, 16, 16), dtype=jnp.float32)
    x_lcm = jnp.zeros((8, 4, 16, 16), dtype=jnp.float32)  # exercises lcm path

    out_small = jax.block_until_ready(vertices_forward(x_small, vertices))
    out_lcm = jax.block_until_ready(vertices_forward(x_lcm, vertices))

    ref_small = jnp.broadcast_to(vertices, (2, V, 3))
    ref_lcm = jnp.broadcast_to(vertices, (8, V, 3))

    assert out_small.shape == (2, V, 3) and out_small.dtype == jnp.float32
    assert out_lcm.shape == (8, V, 3) and out_lcm.dtype == jnp.float32
    assert bool(jnp.all(out_small == ref_small))
    assert bool(jnp.all(out_lcm == ref_lcm))

    print("KERNEL_OK")
</pallas_src>

<mosaic_0001>
module attributes {stable_mosaic.version = 11 : i64} {
  func.func @_vertices_expand_kernel(%arg0: i32, %arg1: memref<1x96xf32, #tpu.memory_space<vmem>>, %arg2: memref<2x96xf32, #tpu.memory_space<vmem>>) attributes {dimension_semantics = [#tpu.dimension_semantics<parallel>], iteration_bounds = array<i64: 1>, scalar_prefetch = 0 : i64, scratch_operands = 0 : i64, tpu.core_type = #tpu.core_type<tc>, window_params = [{pipeline_mode = #tpu.pipeline_mode<synchronous>, transform_indices = @transform_0, window_bounds = array<i64: 1, 96>}, {transform_indices = @transform_1, window_bounds = array<i64: 2, 96>}]} {
    %c0 = arith.constant 0 : index
    %c0_0 = arith.constant 0 : index
    %0 = vector.load %arg1[%c0, %c0_0] : memref<1x96xf32, #tpu.memory_space<vmem>>, vector<1x96xf32>
    %1 = vector.shape_cast %0 : vector<1x96xf32> to vector<1x96xf32>
    %2 = vector.broadcast %1 : vector<1x96xf32> to vector<2x96xf32>
    %c0_1 = arith.constant 0 : index
    %c0_2 = arith.constant 0 : index
    %3 = vector.load %arg2[%c0_1, %c0_2] : memref<2x96xf32, #tpu.memory_space<vmem>>, vector<2x96xf32>
    tpu.vector_store %arg2[%c0_1, %c0_2], %2 {strides = array<i32>} : memref<2x96xf32, #tpu.memory_space<vmem>>, vector<2x96xf32>,
    return
  }
  func.func @transform_0(%arg0: i32) -> (i32, i32) {
    %c0_i32 = arith.constant 0 : i32
    %c0_i32_0 = arith.constant 0 : i32
    %c0_i32_1 = arith.constant 0 : i32
    return %c0_i32, %c0_i32_0 : i32, i32
  }
  func.func @transform_1(%arg0: i32) -> (i32, i32) {
    %c0_i32 = arith.constant 0 : i32
    %c0_i32_0 = arith.constant 0 : i32
    return %arg0, %c0_i32 : i32, i32
  }
}

</mosaic_0001>

<llo_original>
// kernel: tpu_custom_call.1
$region0: #{tpu_custom_call.1}
  #allocation0 [shape = 'u32[]', space=smem, size = 0x4, offset = 0x4, fixed_abs, tag = 'smem constant byte address 0x4 - core index']
  #allocation1 [shape = 'u32[144,128]{1,0:T(1,128)}', space=vmem, size = 0x12000, scoped, tag = 'internal scratch']
  %s0 = inlined_call_operand.hbm [shape: f32[1,96], index: 0, kind: input, shape index: {}]
  %s1 = inlined_call_operand.hbm [shape: f32[2,96], index: 1, kind: output, shape index: {}]
  %s2 = sld [smem:[#allocation0]]
  $region18: #{tpu_custom_call.1} parent=0
    _
  %s4 = ssub.s32 1, %s2
  %s5 = scalar_select 0, %s4, %s2
  $region1: #{tpu_custom_call.1} parent=0
    #allocation2 [shape = 'u8[512]{0}', space=vmem, size = 0x400, scoped, tag = 'input window, operand 0, single buffered']
    #allocation3 [shape = 's32[1]{0}', space=sflag, size = 0x4, scoped, tag = 'scoped memory for tpu_custom_call.1']
    #allocation4 [shape = 's32[1]{0}', space=sflag, size = 0x4, scoped, tag = 'scoped memory for tpu_custom_call.1']
    #allocation5 [shape = 'u8[1024]{0}', space=vmem, size = 0x400, scoped, tag = 'output window, operand 0, single buffered']
    %6 = vsyncpa [#allocation3], 0
    %7 = vsyncpa [#allocation4], 0
    // Predicated region
    $region2: #{tpu_custom_call.1} parent=1 // pred_check
      _
    $region3: #{tpu_custom_call.1} parent=1 // pred_check_branch
      %9 = sbr.rel (0) target = $region5
    $region4: #{tpu_custom_call.1} parent=1 // pred_region
      %s11 = ssub.s32 16, 16
      %12 = vsyncadd [#allocation3], %s11
      %s14 = sshll.u32 [#allocation2], 4
      %s15 = int_to_ptr.vmem [resolvable:$true] %s14
      %17 = dma.hbm_to_vmem [thread:$0]  %s0, 16, %s15, [#allocation3]
    $region5: #{tpu_custom_call.1} parent=1 // pred_fallthru
      _
    // Predicated region
    $region6: #{tpu_custom_call.1} parent=1 // pred_check
      _
    $region7: #{tpu_custom_call.1} parent=1 // pred_check_branch
      %19 = sbr.rel (0) target = $region9
    $region8: #{tpu_custom_call.1} parent=1 // pred_region
      %20 = dma.done [#allocation3], 16
    $region9: #{tpu_custom_call.1} parent=1 // pred_fallthru
      _
    %v21 = vld [vmem:[#allocation2] sm:$0x1]
    %v23 = vlaneseq
    %v24 = vshrl.u32 %v23, 7
    %v25 = vsub.s32 0, %v24
    %v26 = vrot.slane %v21, %v25
    %vm28 = vcmask 779264
    %29 = vst.msk [vmem:[#allocation5] sm:$0x3] %vm28, %v26
    // Predicated region
    $region10: #{tpu_custom_call.1} parent=1 // pred_check
      _
    $region11: #{tpu_custom_call.1} parent=1 // pred_check_branch
      %31 = sbr.rel (0) target = $region13
    $region12: #{tpu_custom_call.1} parent=1 // pred_region
      %s33 = ssub.s32 32, 32
      %34 = vsyncadd [#allocation4], %s33
      %s36 = sshll.u32 [#allocation5], 4
      %s37 = int_to_ptr.vmem [resolvable:$true] %s36
      %39 = dma.vmem_to_hbm [thread:$0]  %s37, 32, %s1, [#allocation4]
    $region13: #{tpu_custom_call.1} parent=1 // pred_fallthru
      _
    // Predicated region
    $region14: #{tpu_custom_call.1} parent=1 // pred_check
      _
    $region15: #{tpu_custom_call.1} parent=1 // pred_check_branch
      %41 = sbr.rel (0) target = $region17
    $region16: #{tpu_custom_call.1} parent=1 // pred_region
      %42 = dma.done [#allocation4], 32
    $region17: #{tpu_custom_call.1} parent=1 // pred_fallthru
      _
    %43 = vsyncpa [#allocation3], 1
    %44 = vsyncpa [#allocation4], 1

</llo_original>
